<compile_context>
chip_gen: v5e
topology: v5e:2x2
jax: 0.10.0
libtpu: 0.0.40
codegen_flags: <defaults>
</compile_context>

<pallas_src>
import jax
import jax.numpy as jnp
from jax.experimental import pallas as pl
from jax.experimental.pallas import tpu as pltpu

_LANE = 128
_TARGET_BLOCK_BYTES = 4 << 20          # ~4 MiB per block (v6e/v7x sweet spot)
_VMEM_LIMIT_BYTES = 32 * 1024 * 1024   # covers 2 bufs x (in + out) x 4 MiB + headroom


# ---------------- backward kernel ----------------

def _reverse_grad_kernel(coeff_ref, g_ref, o_ref):
    # dx = -coeff * dy, computed in the cotangent's native dtype
    # (native bf16 VALU on v6e/v7x; exact for f32).
    neg_coeff = (-coeff_ref[0]).astype(g_ref.dtype)
    o_ref[...] = g_ref[...] * neg_coeff


# ---------------- tiling helpers ----------------

def _sublane_pack(dtype):
    # 32-bit -> 8 rows/vreg, 16-bit -> 16, 8-bit -> 32
    return max(8, 32 // jnp.dtype(dtype).itemsize)


def _row_tile(rows, cols, dtype):
    pack = _sublane_pack(dtype)
    itemsize = jnp.dtype(dtype).itemsize
    target_rows = max(pack, (_TARGET_BLOCK_BYTES // (cols * itemsize)) // pack * pack)
    tr = min(rows, target_rows)
    # v7x megacore: prefer >=2 grid steps so the "parallel" axis can be split
    # across both TensorCores (harmless extra step on single-TC chips).
    if tr == rows and rows > pack:
        half = (((rows + 1) // 2) + pack - 1) // pack * pack
        tr = min(rows, max(pack, half))
    return max(1, tr)


def _as_2d(x):
    """Lane-dense 2D view with minimal data movement.

    Prefers the tensor's native wide last dim (multiple of 128 lanes), then a
    zero-copy (-1, 128) reshape, and only pads for truly ragged sizes.
    """
    if x.ndim >= 2 and x.shape[-1] % _LANE == 0 and x.shape[-1] > 0:
        return x.reshape(-1, x.shape[-1]), 0
    n = x.size
    if n % _LANE == 0 and n > 0:
        return x.reshape(-1, _LANE), 0
    pad = (-n) % _LANE
    flat = jnp.pad(x.reshape(-1), (0, pad))
    return flat.reshape(-1, _LANE), pad


def _from_2d(y2d, pad, shape):
    if pad:
        y2d = y2d.reshape(-1)[: y2d.size - pad]
    return y2d.reshape(shape)


def _reverse_grad_2d(g2d, coeff_arr):
    rows, cols = g2d.shape
    tr = _row_tile(rows, cols, g2d.dtype)
    grid = (pl.cdiv(rows, tr),)
    return pl.pallas_call(
        _reverse_grad_kernel,
        out_shape=jax.ShapeDtypeStruct((rows, cols), g2d.dtype),
        grid_spec=pltpu.PrefetchScalarGridSpec(
            num_scalar_prefetch=0,
            grid=grid,
            in_specs=[
                pl.BlockSpec(memory_space=pltpu.MemorySpace.SMEM),  # coeff (1,)
                pl.BlockSpec((tr, cols), lambda i: (i, 0)),         # cotangent
            ],
            out_specs=pl.BlockSpec((tr, cols), lambda i: (i, 0)),
        ),
        compiler_params=pltpu.CompilerParams(
            dimension_semantics=("parallel",),
            vmem_limit_bytes=_VMEM_LIMIT_BYTES,
        ),
        input_output_aliases={1: 0},  # donate the dead cotangent buffer as dx
    )(coeff_arr, g2d)


# ---------------- GRL: identity forward + reversed-gradient backward ----------------

@jax.custom_vjp
def _grl(x, coeff):
    # Forward of GradientReverseFunction: output = input * 1.0  -> identity.
    # Metadata no-op: no kernel, no HBM traffic (perf review).
    del coeff
    return x


def _grl_fwd(x, coeff):
    return x, coeff


def _grl_bwd(coeff, g):
    g2d, pad = _as_2d(g)
    coeff_arr = jnp.reshape(coeff, (1,)).astype(jnp.float32)
    dx2d = _reverse_grad_2d(g2d, coeff_arr)
    dx = _from_2d(dx2d, pad, g.shape)
    return dx, jnp.zeros_like(coeff)   # PyTorch returns None for coeff


_grl.defvjp(_grl_fwd, _grl_bwd)


def gradient_reverse_layer(x, coeff=1.0):
    """JAX/Pallas GradientReverseLayer: identity forward, dx = -coeff * dy."""
    return _grl(x, jnp.asarray(coeff, jnp.float32))


class GradientReverseLayer:
    """Thin module-style wrapper mirroring the PyTorch nn.Module."""

    def __call__(self, x, coeff=1.0):
        return gradient_reverse_layer(x, coeff)


# ---------------- demo ----------------

if __name__ == "__main__":
    key = jax.random.PRNGKey(0)
    x = jax.random.normal(key, (2, 4, 16, 16), dtype=jnp.float32)  # NCHW

    layer = GradientReverseLayer()

    # forward: must be an exact identity (and is a no-op, not a copy)
    y = jax.block_until_ready(layer(x, 1.0))
    assert y.shape == x.shape and y.dtype == x.dtype
    assert jnp.allclose(y, x), "forward of GRL must be identity"

    # backward: d/dx sum(GRL(x, coeff)) == -coeff everywhere (Pallas kernel)
    coeff = 0.5
    grad = jax.block_until_ready(
        jax.grad(lambda a: jnp.sum(gradient_reverse_layer(a, coeff)))(x))
    assert grad.shape == x.shape and grad.dtype == x.dtype
    assert jnp.allclose(grad, -coeff * jnp.ones_like(x)), "reversed grad mismatch"

    # ramped coeff under one jit compile (coeff flows through SMEM, no rebuild)
    grad_fn = jax.jit(jax.grad(lambda a, c: jnp.sum(gradient_reverse_layer(a, c))))
    for c in (0.25, 1.0, 2.0):
        dx = jax.block_until_ready(grad_fn(x, jnp.float32(c)))
        assert jnp.allclose(dx, -c * jnp.ones_like(x)), "ramped coeff grad mismatch"

    # wide-last-dim (multiple of 128) bf16 path: native layout, no pad/flatten
    x2 = jax.random.normal(key, (4, 8, 256), dtype=jnp.bfloat16)
    dx2 = jax.block_until_ready(
        jax.grad(lambda a: jnp.sum(gradient_reverse_layer(a, 0.5).astype(jnp.float32)))(x2))
    assert dx2.dtype == jnp.bfloat16
    assert jnp.allclose(dx2.astype(jnp.float32), -0.5 * jnp.ones(x2.shape, jnp.float32))

    print("KERNEL_OK")
</pallas_src>

<mosaic_0001>
module attributes {stable_mosaic.version = 11 : i64} {
  func.func @_reverse_grad_kernel(%arg0: i32, %arg1: memref<1xf32, #tpu.memory_space<smem>>, %arg2: memref<8x128xf32, #tpu.memory_space<vmem>>, %arg3: memref<8x128xf32, #tpu.memory_space<vmem>>) attributes {dimension_semantics = [#tpu.dimension_semantics<parallel>], iteration_bounds = array<i64: 2>, scalar_prefetch = 0 : i64, scratch_operands = 0 : i64, tpu.core_type = #tpu.core_type<tc>, window_params = [{transform_indices = @transform_0, window_bounds = array<i64: 1>}, {transform_indices = @transform_1, window_bounds = array<i64: 8, 128>}, {transform_indices = @transform_2, window_bounds = array<i64: 8, 128>}]} {
    %c0 = arith.constant 0 : index
    %0 = memref.load %arg1[%c0] : memref<1xf32, #tpu.memory_space<smem>>
    %cst = arith.constant 0.000000e+00 : f32
    %1 = arith.subf %cst, %0 : f32
    %c0_0 = arith.constant 0 : index
    %c0_1 = arith.constant 0 : index
    %2 = vector.load %arg2[%c0_0, %c0_1] : memref<8x128xf32, #tpu.memory_space<vmem>>, vector<8x128xf32>
    %3 = vector.broadcast %1 : f32 to vector<8x128xf32>
    %4 = arith.mulf %2, %3 : vector<8x128xf32>
    %c0_2 = arith.constant 0 : index
    %c0_3 = arith.constant 0 : index
    %5 = vector.load %arg3[%c0_2, %c0_3] : memref<8x128xf32, #tpu.memory_space<vmem>>, vector<8x128xf32>
    tpu.vector_store %arg3[%c0_2, %c0_3], %4 {strides = array<i32>} : memref<8x128xf32, #tpu.memory_space<vmem>>, vector<8x128xf32>,
    return
  }
  func.func @transform_0(%arg0: i32) -> i32 {
    %c0_i32 = arith.constant 0 : i32
    %c0_i32_0 = arith.constant 0 : i32
    return %c0_i32 : i32
  }
  func.func @transform_1(%arg0: i32) -> (i32, i32) {
    %c0_i32 = arith.constant 0 : i32
    %c0_i32_0 = arith.constant 0 : i32
    return %arg0, %c0_i32 : i32, i32
  }
  func.func @transform_2(%arg0: i32) -> (i32, i32) {
    %c0_i32 = arith.constant 0 : i32
    %c0_i32_0 = arith.constant 0 : i32
    return %arg0, %c0_i32 : i32, i32
  }
}

</mosaic_0001>

<llo_original>
// kernel: tpu_custom_call.1
$region0: #{tpu_custom_call.1}
  #allocation0 [shape = 'u32[]', space=smem, size = 0x4, offset = 0x4, fixed_abs, tag = 'smem constant byte address 0x4 - core index']
  #allocation1 [shape = 'u32[72,128]{1,0:T(1,128)}', space=vmem, size = 0x9000, scoped, tag = 'internal scratch']
  #allocation2 [shape = 'f32[1]{0:T(128)S(6)}', space=smem, size = 0x200, scoped, tag = 'scoped memory for tpu_custom_call.1']
  %s0 = inlined_call_operand.<no memory space> [shape: f32[1], index: 0, kind: input, shape index: {}]
  %s1 = inlined_call_operand.hbm [shape: f32[16,128], index: 1, kind: input, shape index: {}, may-alias: {1,2}]
  %s2 = inlined_call_operand.hbm [shape: f32[16,128], index: 2, kind: output, shape index: {}, may-alias: {1,2}]
  %s3 = sld [smem:[#allocation0]]
  $region45: #{tpu_custom_call.1} parent=0
    _
  %s5 = ssub.s32 1, %s3
  %s6 = scalar_select 0, %s5, %s3
  %7 = sst [smem:[#allocation2]] %s0
  $region1: #{tpu_custom_call.1} parent=0
    #allocation3 [shape = 'u8[8192]{0}', space=vmem, size = 0x2000, scoped, tag = 'input window, operand 1']
    #allocation4 [shape = 's32[2]{0}', space=sflag, size = 0x8, scoped, tag = 'scoped memory for tpu_custom_call.1']
    #allocation5 [shape = 's32[2]{0}', space=sflag, size = 0x8, scoped, tag = 'scoped memory for tpu_custom_call.1']
    #allocation6 [shape = 'u8[8192]{0}', space=vmem, size = 0x2000, scoped, tag = 'output window, operand 0']
    %8 = vsyncpa [#allocation4], 0
    %s9 = scalar_lea.sflag [#allocation4], 1
    %10 = vsyncpa %s9, 0
    %11 = vsyncpa [#allocation5], 0
    %s12 = scalar_lea.sflag [#allocation5], 1
    %13 = vsyncpa %s12, 0
    loop: start=0, step=1, limit=4
    $region2: #{tpu_custom_call.1} parent=1 // loop_pre_header
      _
    $region3: #{tpu_custom_call.1} parent=1 // loop_header
      %s15 = sphi 0, %s19
      %p16 = scmp.ge.s32.totalorder %s15, 4
      %s23 = sphi 0, %s23
      %s25 = sphi 0, %s23
      %s26 = sphi 0, %s25
      %s40 = sphi 0, %s26
      %s46 = sphi 0, %s48
      %s49 = sphi 0, %s46
      %s50 = sphi 0, %s49
      %s66 = sphi 0, %s50
      %s72 = sphi 0, %s74
      %s75 = sphi 0, %s72
      %s76 = sphi 0, %s75
      %s92 = sphi 0, %s76
    $region4: #{tpu_custom_call.1} parent=1 // loop_header_branch
      %18 = sbr.rel (%p16) target = $region8
    $region5: #{tpu_custom_call.1} parent=1 // loop_body
      %s20 = ssub.s32 %s15, 1
      %s21 = ssub.s32 %s15, 2
      %s22 = sadd.s32 %s15, 1
      %s24 = sadd.s32 %s23, 1
      %p27 = scmp.eq.s32.totalorder %s15, 1
      %p28 = scmp.ne.s32.totalorder %s23, %s25
      %p29 = scmp.eq.s32.totalorder %s15, 0
      %p30 = por %p28, %p29
      %p31 = scmp.ne.s32.totalorder %s23, %s25
      %p32 = scmp.eq.s32.totalorder %s20, 1
      %p33 = por %p31, %p32
      %p34 = scmp.ne.s32.totalorder %s25, %s26
      %p35 = scmp.eq.s32.totalorder %s20, 0
      %p36 = por %p34, %p35
      %p37 = scmp.ne.s32.totalorder %s25, %s26
      %p38 = scmp.eq.s32.totalorder %s21, 1
      %p39 = por %p37, %p38
      %p41 = scmp.ne.s32.totalorder %s26, %s40
      %p42 = scmp.eq.s32.totalorder %s21, 0
      %p43 = por %p41, %p42
      %s44 = ssub.s32 %s15, %s22
      %p45 = scmp.eq.s32.totalorder %s44, 0
      %s47 = sadd.s32 %s46, 1
      %s48 = scalar_select %p45, %s46, %s47
      %p51 = pneg %p45
      %p52 = scmp.eq.s32.totalorder %s15, 1
      %p53 = por %p51, %p52
      %p54 = scmp.ne.s32.totalorder %s46, %s49
      %p55 = scmp.eq.s32.totalorder %s15, 0
      %p56 = por %p54, %p55
      %p57 = scmp.ne.s32.totalorder %s46, %s49
      %p58 = scmp.eq.s32.totalorder %s20, 1
      %p59 = por %p57, %p58
      %p60 = scmp.ne.s32.totalorder %s49, %s50
      %p61 = scmp.eq.s32.totalorder %s20, 0
      %p62 = por %p60, %p61
      %p63 = scmp.ne.s32.totalorder %s49, %s50
      %p64 = scmp.eq.s32.totalorder %s21, 1
      %p65 = por %p63, %p64
      %p67 = scmp.ne.s32.totalorder %s50, %s66
      %p68 = scmp.eq.s32.totalorder %s21, 0
      %p69 = por %p67, %p68
      %s70 = ssub.s32 %s15, %s22
      %p71 = scmp.eq.s32.totalorder %s70, 0
      %s73 = sadd.s32 %s72, 1
      %s74 = scalar_select %p71, %s72, %s73
      %p77 = pneg %p71
      %p78 = scmp.eq.s32.totalorder %s15, 1
      %p79 = por %p77, %p78
      %p80 = scmp.ne.s32.totalorder %s72, %s75
      %p81 = scmp.eq.s32.totalorder %s15, 0
      %p82 = por %p80, %p81
      %p83 = scmp.ne.s32.totalorder %s72, %s75
      %p84 = scmp.eq.s32.totalorder %s20, 1
      %p85 = por %p83, %p84
      %p86 = scmp.ne.s32.totalorder %s75, %s76
      %p87 = scmp.eq.s32.totalorder %s20, 0
      %p88 = por %p86, %p87
      %p89 = scmp.ne.s32.totalorder %s75, %s76
      %p90 = scmp.eq.s32.totalorder %s21, 1
      %p91 = por %p89, %p90
      %p93 = scmp.ne.s32.totalorder %s76, %s92
      %p94 = scmp.eq.s32.totalorder %s21, 0
      %p95 = por %p93, %p94
      %p96 = scmp.le.s32.totalorder 1, %s15
      %p97 = scmp.lt.s32.totalorder %s15, 3
      %p98 = pnand %p96, %p97
      %p99 = pneg %p98
      // Predicated region
      $region9: #{tpu_custom_call.1} parent=5 // pred_check
        _
      $region10: #{tpu_custom_call.1} parent=5 // pred_check_branch
        %101 = sbr.rel (%p98) target = $region12
      $region11: #{tpu_custom_call.1} parent=5 // pred_region
        %s102 = ssub.s32 %s15, 1
        // Predicated region
        $region13: #{tpu_custom_call.1} parent=11 // pred_check
          %p103 = pneg %p36
        $region14: #{tpu_custom_call.1} parent=11 // pred_check_branch
          %105 = sbr.rel (%p103) target = $region16
        $region15: #{tpu_custom_call.1} parent=11 // pred_region
          _
        $region16: #{tpu_custom_call.1} parent=11 // pred_fallthru
          _
      $region12: #{tpu_custom_call.1} parent=5 // pred_fallthru
        _
      %p106 = scmp.lt.s32.totalorder %s15, 2
      // Predicated region
      $region17: #{tpu_custom_call.1} parent=5 // pred_check
        %p107 = pneg %p106
      $region18: #{tpu_custom_call.1} parent=5 // pred_check_branch
        %109 = sbr.rel (%p107) target = $region20
      $region19: #{tpu_custom_call.1} parent=5 // pred_region
        // Predicated region
        $region21: #{tpu_custom_call.1} parent=19 // pred_check
          %p110 = pneg %p56
        $region22: #{tpu_custom_call.1} parent=19 // pred_check_branch
          %112 = sbr.rel (%p110) target = $region24
        $region23: #{tpu_custom_call.1} parent=19 // pred_region
          %s113 = sand.u32 %s46, 1
          %s114 = scalar_lea.sflag [#allocation4], %s113
          %s115 = sand.u32 %s46, 1
          %s116 = smul.addr %s115, 8
          %s117 = scalar_lea.vmem [#allocation3], %s116
          %119 = vsyncadd %s114, 0
          %s120 = smul.addr %s15, 8
          %s121 = scalar_lea.hbm %s1, %s120
          %s123 = sshll.u32 %s121, 4
          %s124 = int_to_ptr.hbm [resolvable:$true] %s123
          %s125 = sshll.u32 %s117, 4
          %s126 = int_to_ptr.vmem [resolvable:$true] %s125
          %128 = dma.hbm_to_vmem [thread:$0]  %s124, 128, %s126, %s114
        $region24: #{tpu_custom_call.1} parent=19 // pred_fallthru
          _
      $region20: #{tpu_custom_call.1} parent=5 // pred_fallthru
        _
      %p129 = scmp.le.s32.totalorder 1, %s15
      %p130 = scmp.lt.s32.totalorder %s15, 3
      %p131 = pnand %p129, %p130
      %p132 = pneg %p131
      // Predicated region
      $region25: #{tpu_custom_call.1} parent=5 // pred_check
        _
      $region26: #{tpu_custom_call.1} parent=5 // pred_check_branch
        %134 = sbr.rel (%p131) target = $region28
      $region27: #{tpu_custom_call.1} parent=5 // pred_region
        %s135 = ssub.s32 %s15, 1
        %s136 = sand.u32 %s49, 1
        %s137 = scalar_lea.sflag [#allocation4], %s136
        %s138 = sand.u32 %s49, 1
        %s139 = smul.addr %s138, 8
        %s140 = scalar_lea.vmem [#allocation3], %s139
        // Predicated region
        $region29: #{tpu_custom_call.1} parent=27 // pred_check
          %p141 = pneg %p62
        $region30: #{tpu_custom_call.1} parent=27 // pred_check_branch
          %143 = sbr.rel (%p141) target = $region32
        $region31: #{tpu_custom_call.1} parent=27 // pred_region
          %145 = dma.done %s137, 128
        $region32: #{tpu_custom_call.1} parent=27 // pred_fallthru
          _
        %p146 = pneg %p36
        %p147 = pneg %p33
        %s148 = sand.u32 %s49, 1
        %s149 = scalar_lea.sflag [#allocation4], %s148
        %s150 = sand.u32 %s49, 1
        %s151 = smul.addr %s150, 8
        %s152 = scalar_lea.vmem [#allocation3], %s151
        %p153 = pneg %p62
        %p154 = pneg %p59
        %p155 = pneg %p88
        %p156 = pneg %p85
        %s157 = sand.u32 %s75, 1
        %s158 = scalar_lea.sflag [#allocation5], %s157
        %s159 = sand.u32 %s75, 1
        %s160 = smul.addr %s159, 8
        %s161 = scalar_lea.vmem [#allocation6], %s160
        %s162 = sld [smem:[#allocation2]]
        %s163 = ssub.f32 0.0, %s162
        %v164 = vld [vmem:[%s140] sm:$0xff]
        %v165 = vstv %s163
        %v166 = vmul.f32 %v164, %v165
        %167 = vst [vmem:[%s161] sm:$0xff] %v166
        %s168 = sand.u32 %s75, 1
        %s169 = scalar_lea.sflag [#allocation5], %s168
        %s170 = sand.u32 %s75, 1
        %s171 = smul.addr %s170, 8
        %s172 = scalar_lea.vmem [#allocation6], %s171
        // Predicated region
        $region33: #{tpu_custom_call.1} parent=27 // pred_check
          %p173 = pneg %p85
        $region34: #{tpu_custom_call.1} parent=27 // pred_check_branch
          %175 = sbr.rel (%p173) target = $region36
        $region35: #{tpu_custom_call.1} parent=27 // pred_region
          %177 = vsyncadd %s169, 0
          %s178 = smul.addr %s20, 8
          %s179 = scalar_lea.hbm %s2, %s178
          %s181 = sshll.u32 %s172, 4
          %s182 = int_to_ptr.vmem [resolvable:$true] %s181
          %s183 = sshll.u32 %s179, 4
          %s184 = int_to_ptr.hbm [resolvable:$true] %s183
          %186 = dma.vmem_to_hbm [thread:$0]  %s182, 128, %s184, %s169
        $region36: #{tpu_custom_call.1} parent=27 // pred_fallthru
          _
      $region28: #{tpu_custom_call.1} parent=5 // pred_fallthru
        _
      %p187 = scmp.le.s32.totalorder 2, %s15
      // Predicated region
      $region37: #{tpu_custom_call.1} parent=5 // pred_check
        %p188 = pneg %p187
      $region38: #{tpu_custom_call.1} parent=5 // pred_check_branch
        %190 = sbr.rel (%p188) target = $region40
      $region39: #{tpu_custom_call.1} parent=5 // pred_region
        %s191 = ssub.s32 %s15, 2
        // Predicated region
        $region41: #{tpu_custom_call.1} parent=39 // pred_check
          %p192 = pneg %p91
        $region42: #{tpu_custom_call.1} parent=39 // pred_check_branch
          %194 = sbr.rel (%p192) target = $region44
        $region43: #{tpu_custom_call.1} parent=39 // pred_region
          %s195 = sand.u32 %s76, 1
          %s196 = scalar_lea.sflag [#allocation5], %s195
          %s197 = sand.u32 %s76, 1
          %s198 = smul.addr %s197, 8
          %s199 = scalar_lea.vmem [#allocation6], %s198
          %201 = dma.done %s196, 128
        $region44: #{tpu_custom_call.1} parent=39 // pred_fallthru
          _
      $region40: #{tpu_custom_call.1} parent=5 // pred_fallthru
        _
    $region6: #{tpu_custom_call.1} parent=1 // loop_footer
      %s19 = sadd.s32 1, %s15
    $region7: #{tpu_custom_call.1} parent=1 // loop_footer_branch
      %14 = sbr.rel target = $region3
    $region8: #{tpu_custom_call.1} parent=1 // loop_exit
      _
    %202 = vsyncpa [#allocation4], 1
    %s203 = scalar_lea.sflag [#allocation4], 1
    %204 = vsyncpa %s203, 1
    %205 = vsyncpa [#allocation5], 1
    %s206 = scalar_lea.sflag [#allocation5], 1
    %207 = vsyncpa %s206, 1

</llo_original>
